<compile_context>
chip_gen: v5e
topology: v5e:2x2
jax: 0.10.0
libtpu: 0.0.40
codegen_flags: <defaults>
</compile_context>

<pallas_src>
import jax
import jax.numpy as jnp
from jax.experimental import pallas as pl
from jax.experimental.pallas import tpu as pltpu

H = 256
NEG_SLOPE = 0.01  # F.leaky_relu default
LANE = 128


def _leaky_relu(x):
    return jnp.where(x > 0, x, NEG_SLOPE * x)


def mlp_kernel(x_ref,
               w1_ref, b1_ref,
               w2_ref, b2_ref,
               w3_ref, b3_ref,
               w4_ref, b4_ref,
               w5_ref, b5_ref,
               o_ref):
    def lin(h, w_ref, b_ref):
        w = w_ref[...]
        # Cast the activation to the weight dtype (no-op in f32 mode, bf16 in bf16
        # mode); always accumulate in f32 and keep elementwise ops in f32.
        return jnp.dot(h.astype(w.dtype), w,
                       preferred_element_type=jnp.float32) + b_ref[...]

    h = x_ref[...]
    h = _leaky_relu(lin(h, w1_ref, b1_ref))
    h = _leaky_relu(lin(h, w2_ref, b2_ref))
    h = _leaky_relu(lin(h, w3_ref, b3_ref))
    h = _leaky_relu(lin(h, w4_ref, b4_ref))
    o_ref[...] = lin(h, w5_ref, b5_ref).astype(o_ref.dtype)


def _round_up(x, m):
    return ((x + m - 1) // m) * m


def _nbytes(a):
    return a.size * a.dtype.itemsize


def _num_tensorcores_per_chip():
    """Best-effort detection of TensorCores per chip (2 on v7x, 1 on v5e/v6e)."""
    try:
        info = pltpu.get_tpu_info()
        for attr in ("num_cores", "tensorcores_per_chip", "cores_per_chip",
                     "num_tensorcores"):
            n = getattr(info, attr, None)
            if isinstance(n, int) and n > 0:
                return n
    except Exception:
        pass
    try:
        kind = jax.devices()[0].device_kind.lower().replace(" ", "")
        if "v7" in kind or "tpu7" in kind:
            return 2
    except Exception:
        pass
    return 1


def _choose_batch_tile(B, target, num_cores):
    """Pick a batch tile (multiple of 8) per the perf review."""
    B8 = _round_up(max(B, 1), 8)
    if B8 <= target:
        # Whole batch fits in one tile.  Only split across grid steps when the chip
        # has >1 TensorCore (v7x); on v5e/v6e the grid is a serial loop and splitting
        # only adds ~600 cycles of per-step prologue/epilogue.
        if num_cores >= 2 and B8 >= 16:
            return _round_up(pl.cdiv(B8, num_cores), 8)
        return B8
    # Large batch: prefer a tile in [target//2, target] that divides B exactly so we
    # never have to materialize a padded copy of x; otherwise pad the tail rows.
    for t in range(target, target // 2 - 1, -8):
        if B % t == 0:
            return t
    return target


def mlp_forward(x, params, *, target_tile=512, use_bf16=False):
    """x: (B, D_in) float32. params: list of (W(Din,Dout) , b(1,Dout)) per layer."""
    B, D_in = x.shape
    D_out = params[-1][0].shape[1]

    num_cores = _num_tensorcores_per_chip()
    tb_eff = _choose_batch_tile(B, target_tile, num_cores)
    B_pad = pl.cdiv(B, tb_eff) * tb_eff

    # Pad batch tail rows only when tb_eff does not divide B; pad fc5 output lanes
    # to a multiple of 128 (lane-dense, unmasked stores).
    D_out_pad = _round_up(D_out, LANE)
    x_p = x if B_pad == B else jnp.pad(x, ((0, B_pad - B), (0, 0)))

    w5, b5 = params[-1]
    if D_out_pad != D_out:
        w5 = jnp.pad(w5, ((0, 0), (0, D_out_pad - D_out)))
        b5 = jnp.pad(b5, ((0, 0), (0, D_out_pad - D_out)))
    prepped = list(params[:-1]) + [(w5, b5)]
    if use_bf16:
        # bf16 matmul operands, f32 accumulation (biases / elementwise stay f32).
        prepped = [(w.astype(jnp.bfloat16), b) for (w, b) in prepped]

    def w_spec(shape):
        # Constant block index -> fetched once, stays VMEM-resident across the grid.
        return pl.BlockSpec(shape, lambda i: (0, 0))

    in_specs = [pl.BlockSpec((tb_eff, D_in), lambda i: (i, 0))]
    flat_params = []
    for (w, b) in prepped:
        in_specs.append(w_spec(w.shape))
        in_specs.append(w_spec(b.shape))
        flat_params.extend([w, b])

    flops = 2 * B_pad * (D_in * H + 3 * H * H + H * D_out_pad)
    bytes_accessed = (_nbytes(x_p) + 4 * B_pad * D_out_pad
                      + sum(_nbytes(w) + _nbytes(b) for (w, b) in prepped))

    out = pl.pallas_call(
        mlp_kernel,
        out_shape=jax.ShapeDtypeStruct((B_pad, D_out_pad), jnp.float32),
        grid_spec=pltpu.PrefetchScalarGridSpec(
            num_scalar_prefetch=0,
            grid=(B_pad // tb_eff,),
            in_specs=in_specs,
            out_specs=pl.BlockSpec((tb_eff, D_out_pad), lambda i: (i, 0)),
        ),
        compiler_params=pltpu.CompilerParams(
            dimension_semantics=("parallel",)),
        cost_estimate=pl.CostEstimate(
            flops=flops, transcendentals=0, bytes_accessed=bytes_accessed),
    )(x_p, *flat_params)

    if B_pad != B or D_out_pad != D_out:
        out = out[:B, :D_out]
    return out


def init_params(key, input_dim, output_dim):
    """PyTorch nn.Linear-style init (uniform +/- 1/sqrt(fan_in)), deterministic."""
    dims = [input_dim, H, H, H, H, output_dim]
    params = []
    for i in range(5):
        fan_in, fan_out = dims[i], dims[i + 1]
        key, kw, kb = jax.random.split(key, 3)
        bound = 1.0 / jnp.sqrt(fan_in)
        # store W transposed: (fan_in, fan_out) so the kernel computes x @ W + b
        w = jax.random.uniform(kw, (fan_in, fan_out), jnp.float32, -bound, bound)
        b = jax.random.uniform(kb, (1, fan_out), jnp.float32, -bound, bound)
        params.append((w, b))
    return params


def reference_forward(x, params):
    h = x
    for i, (w, b) in enumerate(params):
        h = h @ w + b
        if i < 4:
            h = jnp.where(h > 0, h, NEG_SLOPE * h)
    return h


if __name__ == "__main__":
    key = jax.random.PRNGKey(0)
    k_x, k_p = jax.random.split(key)

    batch, input_dim, output_dim = 16, 32, 8
    x = jax.random.normal(k_x, (batch, input_dim), jnp.float32)
    params = init_params(k_p, input_dim, output_dim)

    out = jax.block_until_ready(mlp_forward(x, params))
    ref = reference_forward(x, params)
    assert out.shape == (batch, output_dim)
    assert jnp.allclose(out, ref, atol=1e-4, rtol=1e-4)

    # Batch that is not a multiple of 8 / tile: exercises the tail-row padding path.
    x2 = jax.random.normal(jax.random.PRNGKey(1), (13, input_dim), jnp.float32)
    out2 = jax.block_until_ready(mlp_forward(x2, params))
    assert out2.shape == (13, output_dim)
    assert jnp.allclose(out2, reference_forward(x2, params), atol=1e-4, rtol=1e-4)

    # Optional bf16-operand / f32-accumulate path (looser tolerance by design).
    out3 = jax.block_until_ready(mlp_forward(x, params, use_bf16=True))
    assert out3.shape == (batch, output_dim)
    assert jnp.allclose(out3, ref, atol=5e-2, rtol=5e-2)

    print("KERNEL_OK")
</pallas_src>

<mosaic_0001>
module attributes {stable_mosaic.version = 11 : i64} {
  func.func @mlp_kernel(%arg0: i32, %arg1: memref<16x32xf32, #tpu.memory_space<vmem>>, %arg2: memref<32x256xf32, #tpu.memory_space<vmem>>, %arg3: memref<1x256xf32, #tpu.memory_space<vmem>>, %arg4: memref<256x256xf32, #tpu.memory_space<vmem>>, %arg5: memref<1x256xf32, #tpu.memory_space<vmem>>, %arg6: memref<256x256xf32, #tpu.memory_space<vmem>>, %arg7: memref<1x256xf32, #tpu.memory_space<vmem>>, %arg8: memref<256x256xf32, #tpu.memory_space<vmem>>, %arg9: memref<1x256xf32, #tpu.memory_space<vmem>>, %arg10: memref<256x128xf32, #tpu.memory_space<vmem>>, %arg11: memref<1x128xf32, #tpu.memory_space<vmem>>, %arg12: memref<16x128xf32, #tpu.memory_space<vmem>>) attributes {dimension_semantics = [#tpu.dimension_semantics<parallel>], iteration_bounds = array<i64: 1>, scalar_prefetch = 0 : i64, scratch_operands = 0 : i64, tpu.core_type = #tpu.core_type<tc>, window_params = [{transform_indices = @transform_0, window_bounds = array<i64: 16, 32>}, {pipeline_mode = #tpu.pipeline_mode<synchronous>, transform_indices = @transform_1, window_bounds = array<i64: 32, 256>}, {pipeline_mode = #tpu.pipeline_mode<synchronous>, transform_indices = @transform_2, window_bounds = array<i64: 1, 256>}, {pipeline_mode = #tpu.pipeline_mode<synchronous>, transform_indices = @transform_3, window_bounds = array<i64: 256, 256>}, {pipeline_mode = #tpu.pipeline_mode<synchronous>, transform_indices = @transform_4, window_bounds = array<i64: 1, 256>}, {pipeline_mode = #tpu.pipeline_mode<synchronous>, transform_indices = @transform_5, window_bounds = array<i64: 256, 256>}, {pipeline_mode = #tpu.pipeline_mode<synchronous>, transform_indices = @transform_6, window_bounds = array<i64: 1, 256>}, {pipeline_mode = #tpu.pipeline_mode<synchronous>, transform_indices = @transform_7, window_bounds = array<i64: 256, 256>}, {pipeline_mode = #tpu.pipeline_mode<synchronous>, transform_indices = @transform_8, window_bounds = array<i64: 1, 256>}, {pipeline_mode = #tpu.pipeline_mode<synchronous>, transform_indices = @transform_9, window_bounds = array<i64: 256, 128>}, {pipeline_mode = #tpu.pipeline_mode<synchronous>, transform_indices = @transform_10, window_bounds = array<i64: 1, 128>}, {transform_indices = @transform_11, window_bounds = array<i64: 16, 128>}]} {
    %c0 = arith.constant 0 : index
    %c0_0 = arith.constant 0 : index
    %0 = vector.load %arg1[%c0, %c0_0] : memref<16x32xf32, #tpu.memory_space<vmem>>, vector<16x32xf32>
    %c0_1 = arith.constant 0 : index
    %c0_2 = arith.constant 0 : index
    %1 = vector.load %arg2[%c0_1, %c0_2] : memref<32x256xf32, #tpu.memory_space<vmem>>, vector<32x256xf32>
    %cst = arith.constant dense<0.000000e+00> : vector<16x256xf32>
    %2 = tpu.matmul %0, %1, %cst {dimension_numbers = #tpu.dot_dimension_numbers<[1], [0], [0], [1], [0, 0, 1, 1], [], []>} : vector<16x32xf32>, vector<32x256xf32>, vector<16x256xf32> -> vector<16x256xf32>
    %c0_3 = arith.constant 0 : index
    %c0_4 = arith.constant 0 : index
    %3 = vector.load %arg3[%c0_3, %c0_4] : memref<1x256xf32, #tpu.memory_space<vmem>>, vector<1x256xf32>
    %4 = vector.broadcast %3 : vector<1x256xf32> to vector<16x256xf32>
    %5 = arith.addf %2, %4 : vector<16x256xf32>
    %cst_5 = arith.constant 0.000000e+00 : f32
    %6 = vector.broadcast %cst_5 : f32 to vector<16x256xf32>
    %7 = arith.cmpf ogt, %5, %6 : vector<16x256xf32>
    %cst_6 = arith.constant 0.00999999977 : f32
    %8 = vector.broadcast %cst_6 : f32 to vector<16x256xf32>
    %9 = arith.mulf %8, %5 : vector<16x256xf32>
    %10 = arith.select %7, %5, %9 : vector<16x256xi1>, vector<16x256xf32>
    %c0_7 = arith.constant 0 : index
    %c0_8 = arith.constant 0 : index
    %11 = vector.load %arg4[%c0_7, %c0_8] : memref<256x256xf32, #tpu.memory_space<vmem>>, vector<256x256xf32>
    %cst_9 = arith.constant dense<0.000000e+00> : vector<16x256xf32>
    %12 = tpu.matmul %10, %11, %cst_9 {dimension_numbers = #tpu.dot_dimension_numbers<[1], [0], [0], [1], [0, 0, 1, 1], [], []>} : vector<16x256xf32>, vector<256x256xf32>, vector<16x256xf32> -> vector<16x256xf32>
    %c0_10 = arith.constant 0 : index
    %c0_11 = arith.constant 0 : index
    %13 = vector.load %arg5[%c0_10, %c0_11] : memref<1x256xf32, #tpu.memory_space<vmem>>, vector<1x256xf32>
    %14 = vector.broadcast %13 : vector<1x256xf32> to vector<16x256xf32>
    %15 = arith.addf %12, %14 : vector<16x256xf32>
    %cst_12 = arith.constant 0.000000e+00 : f32
    %16 = vector.broadcast %cst_12 : f32 to vector<16x256xf32>
    %17 = arith.cmpf ogt, %15, %16 : vector<16x256xf32>
    %cst_13 = arith.constant 0.00999999977 : f32
    %18 = vector.broadcast %cst_13 : f32 to vector<16x256xf32>
    %19 = arith.mulf %18, %15 : vector<16x256xf32>
    %20 = arith.select %17, %15, %19 : vector<16x256xi1>, vector<16x256xf32>
    %c0_14 = arith.constant 0 : index
    %c0_15 = arith.constant 0 : index
    %21 = vector.load %arg6[%c0_14, %c0_15] : memref<256x256xf32, #tpu.memory_space<vmem>>, vector<256x256xf32>
    %cst_16 = arith.constant dense<0.000000e+00> : vector<16x256xf32>
    %22 = tpu.matmul %20, %21, %cst_16 {dimension_numbers = #tpu.dot_dimension_numbers<[1], [0], [0], [1], [0, 0, 1, 1], [], []>} : vector<16x256xf32>, vector<256x256xf32>, vector<16x256xf32> -> vector<16x256xf32>
    %c0_17 = arith.constant 0 : index
    %c0_18 = arith.constant 0 : index
    %23 = vector.load %arg7[%c0_17, %c0_18] : memref<1x256xf32, #tpu.memory_space<vmem>>, vector<1x256xf32>
    %24 = vector.broadcast %23 : vector<1x256xf32> to vector<16x256xf32>
    %25 = arith.addf %22, %24 : vector<16x256xf32>
    %cst_19 = arith.constant 0.000000e+00 : f32
    %26 = vector.broadcast %cst_19 : f32 to vector<16x256xf32>
    %27 = arith.cmpf ogt, %25, %26 : vector<16x256xf32>
    %cst_20 = arith.constant 0.00999999977 : f32
    %28 = vector.broadcast %cst_20 : f32 to vector<16x256xf32>
    %29 = arith.mulf %28, %25 : vector<16x256xf32>
    %30 = arith.select %27, %25, %29 : vector<16x256xi1>, vector<16x256xf32>
    %c0_21 = arith.constant 0 : index
    %c0_22 = arith.constant 0 : index
    %31 = vector.load %arg8[%c0_21, %c0_22] : memref<256x256xf32, #tpu.memory_space<vmem>>, vector<256x256xf32>
    %cst_23 = arith.constant dense<0.000000e+00> : vector<16x256xf32>
    %32 = tpu.matmul %30, %31, %cst_23 {dimension_numbers = #tpu.dot_dimension_numbers<[1], [0], [0], [1], [0, 0, 1, 1], [], []>} : vector<16x256xf32>, vector<256x256xf32>, vector<16x256xf32> -> vector<16x256xf32>
    %c0_24 = arith.constant 0 : index
    %c0_25 = arith.constant 0 : index
    %33 = vector.load %arg9[%c0_24, %c0_25] : memref<1x256xf32, #tpu.memory_space<vmem>>, vector<1x256xf32>
    %34 = vector.broadcast %33 : vector<1x256xf32> to vector<16x256xf32>
    %35 = arith.addf %32, %34 : vector<16x256xf32>
    %cst_26 = arith.constant 0.000000e+00 : f32
    %36 = vector.broadcast %cst_26 : f32 to vector<16x256xf32>
    %37 = arith.cmpf ogt, %35, %36 : vector<16x256xf32>
    %cst_27 = arith.constant 0.00999999977 : f32
    %38 = vector.broadcast %cst_27 : f32 to vector<16x256xf32>
    %39 = arith.mulf %38, %35 : vector<16x256xf32>
    %40 = arith.select %37, %35, %39 : vector<16x256xi1>, vector<16x256xf32>
    %c0_28 = arith.constant 0 : index
    %c0_29 = arith.constant 0 : index
    %41 = vector.load %arg10[%c0_28, %c0_29] : memref<256x128xf32, #tpu.memory_space<vmem>>, vector<256x128xf32>
    %cst_30 = arith.constant dense<0.000000e+00> : vector<16x128xf32>
    %42 = tpu.matmul %40, %41, %cst_30 {dimension_numbers = #tpu.dot_dimension_numbers<[1], [0], [0], [1], [0, 0, 1, 1], [], []>} : vector<16x256xf32>, vector<256x128xf32>, vector<16x128xf32> -> vector<16x128xf32>
    %c0_31 = arith.constant 0 : index
    %c0_32 = arith.constant 0 : index
    %43 = vector.load %arg11[%c0_31, %c0_32] : memref<1x128xf32, #tpu.memory_space<vmem>>, vector<1x128xf32>
    %44 = vector.broadcast %43 : vector<1x128xf32> to vector<16x128xf32>
    %45 = arith.addf %42, %44 : vector<16x128xf32>
    %c0_33 = arith.constant 0 : index
    %c0_34 = arith.constant 0 : index
    %46 = vector.load %arg12[%c0_33, %c0_34] : memref<16x128xf32, #tpu.memory_space<vmem>>, vector<16x128xf32>
    tpu.vector_store %arg12[%c0_33, %c0_34], %45 {strides = array<i32>} : memref<16x128xf32, #tpu.memory_space<vmem>>, vector<16x128xf32>,
    return
  }
  func.func @transform_0(%arg0: i32) -> (i32, i32) {
    %c0_i32 = arith.constant 0 : i32
    %c0_i32_0 = arith.constant 0 : i32
    return %arg0, %c0_i32 : i32, i32
  }
  func.func @transform_1(%arg0: i32) -> (i32, i32) {
    %c0_i32 = arith.constant 0 : i32
    %c0_i32_0 = arith.constant 0 : i32
    %c0_i32_1 = arith.constant 0 : i32
    return %c0_i32, %c0_i32_0 : i32, i32
  }
  func.func @transform_2(%arg0: i32) -> (i32, i32) {
    %c0_i32 = arith.constant 0 : i32
    %c0_i32_0 = arith.constant 0 : i32
    %c0_i32_1 = arith.constant 0 : i32
    return %c0_i32, %c0_i32_0 : i32, i32
  }
  func.func @transform_3(%arg0: i32) -> (i32, i32) {
    %c0_i32 = arith.constant 0 : i32
    %c0_i32_0 = arith.constant 0 : i32
    %c0_i32_1 = arith.constant 0 : i32
    return %c0_i32, %c0_i32_0 : i32, i32
  }
  func.func @transform_4(%arg0: i32) -> (i32, i32) {
    %c0_i32 = arith.constant 0 : i32
    %c0_i32_0 = arith.constant 0 : i32
    %c0_i32_1 = arith.constant 0 : i32
    return %c0_i32, %c0_i32_0 : i32, i32
  }
  func.func @transform_5(%arg0: i32) -> (i32, i32) {
    %c0_i32 = arith.constant 0 : i32
    %c0_i32_0 = arith.constant 0 : i32
    %c0_i32_1 = arith.constant 0 : i32
    return %c0_i32, %c0_i32_0 : i32, i32
  }
  func.func @transform_6(%arg0: i32) -> (i32, i32) {
    %c0_i32 = arith.constant 0 : i32
    %c0_i32_0 = arith.constant 0 : i32
    %c0_i32_1 = arith.constant 0 : i32
    return %c0_i32, %c0_i32_0 : i32, i32
  }
  func.func @transform_7(%arg0: i32) -> (i32, i32) {
    %c0_i32 = arith.constant 0 : i32
    %c0_i32_0 = arith.constant 0 : i32
    %c0_i32_1 = arith.constant 0 : i32
    return %c0_i32, %c0_i32_0 : i32, i32
  }
  func.func @transform_8(%arg0: i32) -> (i32, i32) {
    %c0_i32 = arith.constant 0 : i32
    %c0_i32_0 = arith.constant 0 : i32
    %c0_i32_1 = arith.constant 0 : i32
    return %c0_i32, %c0_i32_0 : i32, i32
  }
  func.func @transform_9(%arg0: i32) -> (i32, i32) {
    %c0_i32 = arith.constant 0 : i32
    %c0_i32_0 = arith.constant 0 : i32
    %c0_i32_1 = arith.constant 0 : i32
    return %c0_i32, %c0_i32_0 : i32, i32
  }
  func.func @transform_10(%arg0: i32) -> (i32, i32) {
    %c0_i32 = arith.constant 0 : i32
    %c0_i32_0 = arith.constant 0 : i32
    %c0_i32_1 = arith.constant 0 : i32
    return %c0_i32, %c0_i32_0 : i32, i32
  }
  func.func @transform_11(%arg0: i32) -> (i32, i32) {
    %c0_i32 = arith.constant 0 : i32
    %c0_i32_0 = arith.constant 0 : i32
    return %arg0, %c0_i32 : i32, i32
  }
}

</mosaic_0001>

<llo_original>
// kernel: tpu_custom_call.1
$region0: #{tpu_custom_call.1}
  #allocation0 [shape = 'u32[]', space=smem, size = 0x4, offset = 0x4, fixed_abs, tag = 'smem constant byte address 0x4 - core index']
  #allocation1 [shape = 'u32[72,128]{1,0:T(1,128)}', space=vmem, size = 0x9000, scoped, tag = 'internal scratch']
  %s0 = inlined_call_operand.hbm [shape: f32[16,32], index: 0, kind: input, shape index: {}]
  %s1 = inlined_call_operand.hbm [shape: f32[32,256], index: 1, kind: input, shape index: {}]
  %s2 = inlined_call_operand.hbm [shape: f32[1,256], index: 2, kind: input, shape index: {}]
  %s3 = inlined_call_operand.hbm [shape: f32[256,256], index: 3, kind: input, shape index: {}]
  %s4 = inlined_call_operand.vmem [shape: f32[1,256], index: 4, kind: input, shape index: {}]
  %s5 = inlined_call_operand.hbm [shape: f32[256,256], index: 5, kind: input, shape index: {}]
  %s6 = inlined_call_operand.vmem [shape: f32[1,256], index: 6, kind: input, shape index: {}]
  %s7 = inlined_call_operand.hbm [shape: f32[256,256], index: 7, kind: input, shape index: {}]
  %s8 = inlined_call_operand.vmem [shape: f32[1,256], index: 8, kind: input, shape index: {}]
  %s9 = inlined_call_operand.hbm [shape: f32[256,128], index: 9, kind: input, shape index: {}]
  %s10 = inlined_call_operand.vmem [shape: f32[1,128], index: 10, kind: input, shape index: {}]
  %s11 = inlined_call_operand.hbm [shape: f32[16,128], index: 11, kind: output, shape index: {}]
  %s12 = sld [smem:[#allocation0]]
  $region82: #{tpu_custom_call.1} parent=0
    _
  %s14 = ssub.s32 1, %s12
  %s15 = scalar_select 0, %s14, %s12
  $region1: #{tpu_custom_call.1} parent=0
    #allocation2 [shape = 'u8[8192]{0}', space=vmem, size = 0x2000, scoped, tag = 'input window, operand 0, single buffered']
    #allocation3 [shape = 's32[1]{0}', space=sflag, size = 0x4, scoped, tag = 'scoped memory for tpu_custom_call.1']
    #allocation4 [shape = 's32[1]{0}', space=sflag, size = 0x4, scoped, tag = 'scoped memory for tpu_custom_call.1']
    #allocation5 [shape = 'u8[32768]{0}', space=vmem, size = 0x8000, scoped, tag = 'input window, operand 1, single buffered']
    #allocation6 [shape = 's32[1]{0}', space=sflag, size = 0x4, scoped, tag = 'scoped memory for tpu_custom_call.1']
    #allocation7 [shape = 'u8[1024]{0}', space=vmem, size = 0x400, scoped, tag = 'input window, operand 2, single buffered']
    #allocation8 [shape = 'u8[262144]{0}', space=vmem, size = 0x40000, scoped, tag = 'input window, operand 3, single buffered']
    #allocation9 [shape = 's32[1]{0}', space=sflag, size = 0x4, scoped, tag = 'scoped memory for tpu_custom_call.1']
    #allocation10 [shape = 'u8[262144]{0}', space=vmem, size = 0x40000, scoped, tag = 'input window, operand 5, single buffered']
    #allocation11 [shape = 'u8[262144]{0}', space=vmem, size = 0x40000, scoped, tag = 'input window, operand 7, single buffered']
    #allocation12 [shape = 's32[1]{0}', space=sflag, size = 0x4, scoped, tag = 'scoped memory for tpu_custom_call.1']
    #allocation13 [shape = 'u8[131072]{0}', space=vmem, size = 0x20000, scoped, tag = 'input window, operand 9, single buffered']
    #allocation14 [shape = 'u8[8192]{0}', space=vmem, size = 0x2000, scoped, tag = 'output window, operand 0, single buffered']
    %16 = vsyncpa [#allocation3], 0
    %17 = vsyncpa [#allocation6], 0
    %18 = vsyncpa [#allocation9], 0
    %19 = vsyncpa [#allocation12], 0
    %20 = vsyncpa [#allocation4], 0
    // Predicated region
    $region2: #{tpu_custom_call.1} parent=1 // pred_check
      _
    $region3: #{tpu_custom_call.1} parent=1 // pred_check_branch
      %22 = sbr.rel (0) target = $region5
    $region4: #{tpu_custom_call.1} parent=1 // pred_region
      %24 = vsyncadd [#allocation3], 0
      %s25 = sshll.u32 %s0, 4
      %s26 = int_to_ptr.hbm [resolvable:$true] %s25
      %s27 = sshll.u32 [#allocation2], 4
      %s28 = int_to_ptr.vmem [resolvable:$true] %s27
      %33 = dma.hbm_to_vmem [thread:$0]  %s26, 256, %s28, [#allocation3], 128, 128, 8
    $region5: #{tpu_custom_call.1} parent=1 // pred_fallthru
      _
    // Predicated region
    $region6: #{tpu_custom_call.1} parent=1 // pred_check
      _
    $region7: #{tpu_custom_call.1} parent=1 // pred_check_branch
      %35 = sbr.rel (0) target = $region9
    $region8: #{tpu_custom_call.1} parent=1 // pred_region
      %37 = vsyncadd [#allocation6], 0
      %s38 = sshll.u32 %s1, 4
      %s39 = int_to_ptr.hbm [resolvable:$true] %s38
      %s40 = sshll.u32 [#allocation5], 4
      %s41 = int_to_ptr.vmem [resolvable:$true] %s40
      %46 = dma.hbm_to_vmem [thread:$0]  %s39, 1024, %s41, [#allocation6], 256, 256, 16
    $region9: #{tpu_custom_call.1} parent=1 // pred_fallthru
      _
    // Predicated region
    $region10: #{tpu_custom_call.1} parent=1 // pred_check
      _
    $region11: #{tpu_custom_call.1} parent=1 // pred_check_branch
      %48 = sbr.rel (0) target = $region13
    $region12: #{tpu_custom_call.1} parent=1 // pred_region
      %50 = vsyncadd [#allocation6], 0
      %s52 = sshll.u32 %s2, 4
      %s53 = int_to_ptr.hbm [resolvable:$true] %s52
      %s54 = sshll.u32 [#allocation7], 4
      %s55 = int_to_ptr.vmem [resolvable:$true] %s54
      %57 = dma.hbm_to_vmem [thread:$0]  %s53, 32, %s55, [#allocation6]
    $region13: #{tpu_custom_call.1} parent=1 // pred_fallthru
      _
    // Predicated region
    $region14: #{tpu_custom_call.1} parent=1 // pred_check
      _
    $region15: #{tpu_custom_call.1} parent=1 // pred_check_branch
      %59 = sbr.rel (0) target = $region17
    $region16: #{tpu_custom_call.1} parent=1 // pred_region
      %61 = vsyncadd [#allocation9], 0
      %s62 = sshll.u32 %s3, 4
      %s63 = int_to_ptr.hbm [resolvable:$true] %s62
      %s64 = sshll.u32 [#allocation8], 4
      %s65 = int_to_ptr.vmem [resolvable:$true] %s64
      %70 = dma.hbm_to_vmem [thread:$0]  %s63, 8192, %s65, [#allocation9], 256, 256, 16
    $region17: #{tpu_custom_call.1} parent=1 // pred_fallthru
      _
    // Predicated region
    $region18: #{tpu_custom_call.1} parent=1 // pred_check
      _
    $region19: #{tpu_custom_call.1} parent=1 // pred_check_branch
      %72 = sbr.rel (0) target = $region21
    $region20: #{tpu_custom_call.1} parent=1 // pred_region
      _
    $region21: #{tpu_custom_call.1} parent=1 // pred_fallthru
      _
    // Predicated region
    $region22: #{tpu_custom_call.1} parent=1 // pred_check
      _
    $region23: #{tpu_custom_call.1} parent=1 // pred_check_branch
      %74 = sbr.rel (0) target = $region25
    $region24: #{tpu_custom_call.1} parent=1 // pred_region
      %76 = vsyncadd [#allocation9], 0
      %s77 = sshll.u32 %s5, 4
      %s78 = int_to_ptr.hbm [resolvable:$true] %s77
      %s79 = sshll.u32 [#allocation10], 4
      %s80 = int_to_ptr.vmem [resolvable:$true] %s79
      %85 = dma.hbm_to_vmem [thread:$0]  %s78, 8192, %s80, [#allocation9], 256, 256, 16
    $region25: #{tpu_custom_call.1} parent=1 // pred_fallthru
      _
    // Predicated region
    $region26: #{tpu_custom_call.1} parent=1 // pred_check
      _
    $region27: #{tpu_custom_call.1} parent=1 // pred_check_branch
      %87 = sbr.rel (0) target = $region29
    $region28: #{tpu_custom_call.1} parent=1 // pred_region
      _
    $region29: #{tpu_custom_call.1} parent=1 // pred_fallthru
      _
    // Predicated region
    $region30: #{tpu_custom_call.1} parent=1 // pred_check
      _
    $region31: #{tpu_custom_call.1} parent=1 // pred_check_branch
      %89 = sbr.rel (0) target = $region33
    $region32: #{tpu_custom_call.1} parent=1 // pred_region
      %91 = vsyncadd [#allocation12], 0
      %s92 = sshll.u32 %s7, 4
      %s93 = int_to_ptr.hbm [resolvable:$true] %s92
      %s94 = sshll.u32 [#allocation11], 4
      %s95 = int_to_ptr.vmem [resolvable:$true] %s94
      %100 = dma.hbm_to_vmem [thread:$0]  %s93, 8192, %s95, [#allocation12], 256, 256, 16
    $region33: #{tpu_custom_call.1} parent=1 // pred_fallthru
      _
    // Predicated region
    $region34: #{tpu_custom_call.1} parent=1 // pred_check
      _
    $region35: #{tpu_custom_call.1} parent=1 // pred_check_branch
      %102 = sbr.rel (0) target = $region37
    $region36: #{tpu_custom_call.1} parent=1 // pred_region
      _
    $region37: #{tpu_custom_call.1} parent=1 // pred_fallthru
      _
    // Predicated region
    $region38: #{tpu_custom_call.1} parent=1 // pred_check
      _
    $region39: #{tpu_custom_call.1} parent=1 // pred_check_branch
      %104 = sbr.rel (0) target = $region41
    $region40: #{tpu_custom_call.1} parent=1 // pred_region
      %106 = vsyncadd [#allocation12], 0
      %s107 = sshll.u32 %s9, 4
      %s108 = int_to_ptr.hbm [resolvable:$true] %s107
      %s109 = sshll.u32 [#allocation13], 4
      %s110 = int_to_ptr.vmem [resolvable:$true] %s109
      %115 = dma.hbm_to_vmem [thread:$0]  %s108, 4096, %s110, [#allocation12], 128, 128, 8
    $region41: #{tpu_custom_call.1} parent=1 // pred_fallthru
      _
    // Predicated region
    $region42: #{tpu_custom_call.1} parent=1 // pred_check
      _
    $region43: #{tpu_custom_call.1} parent=1 // pred_check_branch
      %117 = sbr.rel (0) target = $region45
    $region44: #{tpu_custom_call.1} parent=1 // pred_region
      _
    $region45: #{tpu_custom_call.1} parent=1 // pred_fallthru
      _
    // Predicated region
    $region46: #{tpu_custom_call.1} parent=1 // pred_check
      _
    $region47: #{tpu_custom_call.1} parent=1 // pred_check_branch
      %119 = sbr.rel (0) target = $region49
    $region48: #{tpu_custom_call.1} parent=1 // pred_region
      %121 = dma.done [#allocation3], 256
    $region49: #{tpu_custom_call.1} parent=1 // pred_fallthru
      _
    // Predicated region
    $region50: #{tpu_custom_call.1} parent=1 // pred_check
      _
    $region51: #{tpu_custom_call.1} parent=1 // pred_check_branch
      %123 = sbr.rel (0) target = $region53
    $region52: #{tpu_custom_call.1} parent=1 // pred_region
      %125 = dma.done [#allocation6], 1024
    $region53: #{tpu_custom_call.1} parent=1 // pred_fallthru
      _
    // Predicated region
    $region54: #{tpu_custom_call.1} parent=1 // pred_check
      _
    $region55: #{tpu_custom_call.1} parent=1 // pred_check_branch
      %127 = sbr.rel (0) target = $region57
    $region56: #{tpu_custom_call.1} parent=1 // pred_region
      %129 = dma.done [#allocation6], 32
    $region57: #{tpu_custom_call.1} parent=1 // pred_fallthru
      _
    // Predicated region
    $region58: #{tpu_custom_call.1} parent=1 // pred_check
      _
    $region59: #{tpu_custom_call.1} parent=1 // pred_check_branch
      %131 = sbr.rel (0) target = $region61
    $region60: #{tpu_custom_call.1} parent=1 // pred_region
      %133 = dma.done [#allocation9], 8192
    $region61: #{tpu_custom_call.1} parent=1 // pred_fallthru
      _
    // Predicated region
    $region62: #{tpu_custom_call.1} parent=1 // pred_check
      _
    $region63: #{tpu_custom_call.1} parent=1 // pred_check_branch
      %135 = sbr.rel (0) target = $region65
    $region64: #{tpu_custom_call.1} parent=1 // pred_region
      %137 = dma.done [#allocation9], 8192
    $region65: #{tpu_custom_call.1} parent=1 // pred_fallthru
      _
    // Predicated region
    $region66: #{tpu_custom_call.1} parent=1 // pred_check
      _
    $region67: #{tpu_custom_call.1} parent=1 // pred_check_branch
      %139 = sbr.rel (0) target = $region69
    $region68: #{tpu_custom_call.1} parent=1 // pred_region
      %141 = dma.done [#allocation12], 8192
    $region69: #{tpu_custom_call.1} parent=1 // pred_fallthru
      _
    // Predicated region
    $region70: #{tpu_custom_call.1} parent=1 // pred_check
      _
    $region71: #{tpu_custom_call.1} parent=1 // pred_check_branch
      %143 = sbr.rel (0) target = $region73
    $region72: #{tpu_custom_call.1} parent=1 // pred_region
      %145 = dma.done [#allocation12], 4096
    $region73: #{tpu_custom_call.1} parent=1 // pred_fallthru
      _
    %v146 = vld [vmem:[#allocation2] sm:$0xff]
    %v147 = vld [vmem:[#allocation2 + $0x8] sm:$0xff]
    %v148 = vld [vmem:[#allocation5] sm:$0xff]
    %v149 = vld [vmem:[#allocation5 + $0x8] sm:$0xff]
    %v150 = vld [vmem:[#allocation5 + $0x10] sm:$0xff]
    %v151 = vld [vmem:[#allocation5 + $0x18] sm:$0xff]
    %v152 = vld [vmem:[#allocation5 + $0x20] sm:$0xff]
    %v153 = vld [vmem:[#allocation5 + $0x28] sm:$0xff]
    %v154 = vld [vmem:[#allocation5 + $0x30] sm:$0xff]
    %v155 = vld [vmem:[#allocation5 + $0x38] sm:$0xff]
    %v156 = vld [vmem:[#allocation7] sm:$0x3]
    %v158 = vperm.slane %v156, 0
    %v159 = vperm.slane %v156, 1
    %vm162 = vcmask 261120
    %v164 = vsel %vm162, %v146, 0
    %v167 = vsel %vm162, %v147, 0
    %169 = vmatpush.msra.mxu0 0.0
    %170 = vmatpush.msra.mxu0 0.0
    %171 = vmatpush.msra.mxu0 0.0
    %172 = vmatpush.msra.mxu0 0.0
    %173 = vmatpush.msra.mxu0 0.0
    %174 = vmatpush.msra.mxu0 0.0
    %175 = vmatpush.msra.mxu0 0.0
    %176 = vmatpush.msra.mxu0 0.0
    %177 = vmatpush.msra.mxu0 0.0
    %178 = vmatpush.msra.mxu0 0.0
    %179 = vmatpush.msra.mxu0 0.0
    %180 = vmatpush.msra.mxu0 0.0
    %181 = vmatpush.msra.mxu0 %v154
    %182 = vmatpush.msra.mxu0 %v152
    %183 = vmatpush.msra.mxu0 %v150
    %184 = vmatpush.msra.mxu0 %v148
    %185 = vmatmul.f32.gmra.mxu0 %v164
    %v186 = vpop.f32.mrf.mxu0
    %v187 = vadd.f32 %v158, %v186
    %188 = vmatmul.f32.gmra.mxu0 %v167
    %v189 = vpop.f32.mrf.mxu0
    %v190 = vadd.f32 %v158, %v189
    %191 = vdwg.mxu0
    %192 = vmatpush.msra.mxu0 0.0
    %193 = vmatpush.msra.mxu0 0.0
    %194 = vmatpush.msra.mxu0 0.0
    %195 = vmatpush.msra.mxu0 0.0
    %196 = vmatpush.msra.mxu0 0.0
    %197 = vmatpush.msra.mxu0 0.0
    %198 = vmatpush.msra.mxu0 0.0
    %199 = vmatpush.msra.mxu0 0.0
    %200 = vmatpush.msra.mxu0 0.0
    %201 = vmatpush.msra.mxu0 0.0
    %202 = vmatpush.msra.mxu0 0.0
    %203 = vmatpush.msra.mxu0 0.0
    %204 = vmatpush.msra.mxu0 %v155
    %205 = vmatpush.msra.mxu0 %v153
    %206 = vmatpush.msra.mxu0 %v151
    %207 = vmatpush.msra.mxu0 %v149
    %208 = vmatmul.f32.gmra.mxu0 %v164
    %v209 = vpop.f32.mrf.mxu0
    %v210 = vadd.f32 %v159, %v209
    %211 = vmatmul.f32.gmra.mxu0 %v167
    %v212 = vpop.f32.mrf.mxu0
    %v213 = vadd.f32 %v159, %v212
    %214 = vdwg.mxu0
    %vm215 = vcmp.gt.f32.partialorder %v187, 0.0
    %vm216 = vcmp.gt.f32.partialorder %v210, 0.0
    %vm217 = vcmp.gt.f32.partialorder %v190, 0.0
    %vm218 = vcmp.gt.f32.partialorder %v213, 0.0
    %v219 = vmul.f32 %v187, 0.01
    %v220 = vmul.f32 %v210, 0.01
    %v221 = vmul.f32 %v190, 0.01
    %v222 = vmul.f32 %v213, 0.01
    %v223 = vsel %vm215, %v187, %v219
    %v224 = vsel %vm216, %v210, %v220
    %v225 = vsel %vm217, %v190, %v221
    %v226 = vsel %vm218, %v213, %v222
    %v227 = vld [vmem:[#allocation8] sm:$0xff]
    %v228 = vld [vmem:[#allocation8 + $0x8] sm:$0xff]
    %v229 = vld [vmem:[#allocation8 + $0x10] sm:$0xff]
    %v230 = vld [vmem:[#allocation8 + $0x18] sm:$0xff]
    %v231 = vld [vmem:[#allocation8 + $0x20] sm:$0xff]
    %v232 = vld [vmem:[#allocation8 + $0x28] sm:$0xff]
    %v233 = vld [vmem:[#allocation8 + $0x30] sm:$0xff]
    %v234 = vld [vmem:[#allocation8 + $0x38] sm:$0xff]
    %v235 = vld [vmem:[#allocation8 + $0x40] sm:$0xff]
    %v236 = vld [vmem:[#allocation8 + $0x48] sm:$0xff]
    %v237 = vld [vmem:[#allocation8 + $0x50] sm:$0xff]
    %v238 = vld [vmem:[#allocation8 + $0x58] sm:$0xff]
    %v239 = vld [vmem:[#allocation8 + $0x60] sm:$0xff]
    %v240 = vld [vmem:[#allocation8 + $0x68] sm:$0xff]
    %v241 = vld [vmem:[#allocation8 + $0x70] sm:$0xff]
    %v242 = vld [vmem:[#allocation8 + $0x78] sm:$0xff]
    %v243 = vld [vmem:[#allocation8 + $0x80] sm:$0xff]
    %v244 = vld [vmem:[#allocation8 + $0x88] sm:$0xff]
    %v245 = vld [vmem:[#allocation8 + $0x90] sm:$0xff]
    %v246 = vld [vmem:[#allocation8 + $0x98] sm:$0xff]
    %v247 = vld [vmem:[#allocation8 + $0xa0] sm:$0xff]
    %v248 = vld [vmem:[#allocation8 + $0xa8] sm:$0xff]
    %v249 = vld [vmem:[#allocation8 + $0xb0] sm:$0xff]
    %v250 = vld [vmem:[#allocation8 + $0xb8] sm:$0xff]
    %v251 = vld [vmem:[#allocation8 + $0xc0] sm:$0xff]
    %v252 = vld [vmem:[#allocation8 + $0xc8] sm:$0xff]
    %v253 = vld [vmem:[#allocation8 + $0xd0] sm:$0xff]
    %v254 = vld [vmem:[#allocation8 + $0xd8] sm:$0xff]
    %v255 = vld [vmem:[#allocation8 + $0xe0] sm:$0xff]
    %v256 = vld [vmem:[#allocation8 + $0xe8] sm:$0xff]
    %v257 = vld [vmem:[#allocation8 + $0xf0] sm:$0xff]
    %v258 = vld [vmem:[#allocation8 + $0xf8] sm:$0xff]
    %v259 = vld [vmem:[#allocation8 + $0x100] sm:$0xff]
    %v260 = vld [vmem:[#allocation8 + $0x108] sm:$0xff]
    %v261 = vld [vmem:[#allocation8 + $0x110] sm:$0xff]
    %v262 = vld [vmem:[#allocation8 + $0x118] sm:$0xff]
    %v263 = vld [vmem:[#allocation8 + $0x120] sm:$0xff]
    %v264 = vld [vmem:[#allocation8 + $0x128] sm:$0xff]
    %v265 = vld [vmem:[#allocation8 + $0x130] sm:$0xff]
    %v266 = vld [vmem:[#allocation8 + $0x138] sm:$0xff]
    %v267 = vld [vmem:[#allocation8 + $0x140] sm:$0xff]
    %v268 = vld [vmem:[#allocation8 + $0x148] sm:$0xff]
    %v269 = vld [vmem:[#allocation8 + $0x150] sm:$0xff]
    %v270 = vld [vmem:[#allocation8 + $0x158] sm:$0xff]
    %v271 = vld [vmem:[#allocation8 + $0x160] sm:$0xff]
    %v272 = vld [vmem:[#allocation8 + $0x168] sm:$0xff]
    %v273 = vld [vmem:[#allocation8 + $0x170] sm:$0xff]
    %v274 = vld [vmem:[#allocation8 + $0x178] sm:$0xff]
    %v275 = vld [vmem:[#allocation8 + $0x180] sm:$0xff]
    %v276 = vld [vmem:[#allocation8 + $0x188] sm:$0xff]
    %v277 = vld [vmem:[#allocation8 + $0x190] sm:$0xff]
    %v278 = vld [vmem:[#allocation8 + $0x198] sm:$0xff]
    %v279 = vld [vmem:[#allocation8 + $0x1a0] sm:$0xff]
    %v280 = vld [vmem:[#allocation8 + $0x1a8] sm:$0xff]
    %v281 = vld [vmem:[#allocation8 + $0x1b0] sm:$0xff]
    %v282 = vld [vmem:[#allocation8 + $0x1b8] sm:$0xff]
    %v283 = vld [vmem:[#allocation8 + $0x1c0] sm:$0xff]
    %v284 = vld [vmem:[#allocation8 + $0x1c8] sm:$0xff]
    %v285 = vld [vmem:[#allocation8 + $0x1d0] sm:$0xff]
    %v286 = vld [vmem:[#allocation8 + $0x1d8] sm:$0xff]
    %v287 = vld [vmem:[#allocation8 + $0x1e0] sm:$0xff]
    %v288 = vld [vmem:[#allocation8 + $0x1e8] sm:$0xff]
    %v289 = vld [vmem:[#allocation8 + $0x1f0] sm:$0xff]
    %v290 = vld [vmem:[#allocation8 + $0x1f8] sm:$0xff]
    %v291 = vld [vmem:[%s4] sm:$0x3]
    %v293 = vperm.slane %v291, 0
    %v294 = vperm.slane %v291, 1
    %297 = vmatpush.msra.mxu0 %v257
    %298 = vmatpush.msra.mxu0 %v255
    %299 = vmatpush.msra.mxu0 %v253
    %300 = vmatpush.msra.mxu0 %v251
    %301 = vmatpush.msra.mxu0 %v249
    %302 = vmatpush.msra.mxu0 %v247
    %303 = vmatpush.msra.mxu0 %v245
    %304 = vmatpush.msra.mxu0 %v243
    %305 = vmatpush.msra.mxu0 %v241
    %306 = vmatpush.msra.mxu0 %v239
    %307 = vmatpush.msra.mxu0 %v237
    %308 = vmatpush.msra.mxu0 %v235
    %309 = vmatpush.msra.mxu0 %v233
    %310 = vmatpush.msra.mxu0 %v231
    %311 = vmatpush.msra.mxu0 %v229
    %312 = vmatpush.msra.mxu0 %v227
    %313 = vmatmul.f32.gmra.mxu0 %v223
    %v314 = vpop.f32.mrf.mxu0
    %v315 = vadd.f32 %v293, %v314
    %316 = vmatmul.f32.gmra.mxu0 %v225
    %v317 = vpop.f32.mrf.mxu0
    %v318 = vadd.f32 %v293, %v317
    %319 = vdwg.mxu0
    %320 = vmatpush.msra.mxu0 %v289
    %321 = vmatpush.msra.mxu0 %v287
    %322 = vmatpush.msra.mxu0 %v285
    %323 = vmatpush.msra.mxu0 %v283
    %324 = vmatpush.msra.mxu0 %v281
    %325 = vmatpush.msra.mxu0 %v279
    %326 = vmatpush.msra.mxu0 %v277
    %327 = vmatpush.msra.mxu0 %v275
    %328 = vmatpush.msra.mxu0 %v273
    %329 = vmatpush.msra.mxu0 %v271
    %330 = vmatpush.msra.mxu0 %v269
    %331 = vmatpush.msra.mxu0 %v267
    %332 = vmatpush.msra.mxu0 %v265
    %333 = vmatpush.msra.mxu0 %v263
    %334 = vmatpush.msra.mxu0 %v261
    %335 = vmatpush.msra.mxu0 %v259
    %336 = vmatmul.f32.gmra.mxu0 %v224
    %v337 = vpop.f32.mrf.mxu0
    %v338 = vadd.f32 %v315, %v337
    %339 = vmatmul.f32.gmra.mxu0 %v226
    %v340 = vpop.f32.mrf.mxu0
    %v341 = vadd.f32 %v318, %v340
    %342 = vdwg.mxu0
    %343 = vmatpush.msra.mxu0 %v258
    %344 = vmatpush.msra.mxu0 %v256
    %345 = vmatpush.msra.mxu0 %v254
    %346 = vmatpush.msra.mxu0 %v252
    %347 = vmatpush.msra.mxu0 %v250
    %348 = vmatpush.msra.mxu0 %v248
    %349 = vmatpush.msra.mxu0 %v246
    %350 = vmatpush.msra.mxu0 %v244
    %351 = vmatpush.msra.mxu0 %v242
    %352 = vmatpush.msra.mxu0 %v240
    %353 = vmatpush.msra.mxu0 %v238
    %354 = vmatpush.msra.mxu0 %v236
    %355 = vmatpush.msra.mxu0 %v234
    %356 = vmatpush.msra.mxu0 %v232
    %357 = vmatpush.msra.mxu0 %v230
    %358 = vmatpush.msra.mxu0 %v228
    %359 = vmatmul.f32.gmra.mxu0 %v223
    %v360 = vpop.f32.mrf.mxu0
    %v361 = vadd.f32 %v294, %v360
    %362 = vmatmul.f32.gmra.mxu0 %v225
    %v363 = vpop.f32.mrf.mxu0
    %v364 = vadd.f32 %v294, %v363
    %365 = vdwg.mxu0
    %366 = vmatpush.msra.mxu0 %v290
    %367 = vmatpush.msra.mxu0 %v288
    %368 = vmatpush.msra.mxu0 %v286
    %369 = vmatpush.msra.mxu0 %v284
    %370 = vmatpush.msra.mxu0 %v282
    %371 = vmatpush.msra.mxu0 %v280
    %372 = vmatpush.msra.mxu0 %v278
    %373 = vmatpush.msra.mxu0 %v276
    %374 = vmatpush.msra.mxu0 %v274
    %375 = vmatpush.msra.mxu0 %v272
    %376 = vmatpush.msra.mxu0 %v270
    %377 = vmatpush.msra.mxu0 %v268
    %378 = vmatpush.msra.mxu0 %v266
    %379 = vmatpush.msra.mxu0 %v264
    %380 = vmatpush.msra.mxu0 %v262
    %381 = vmatpush.msra.mxu0 %v260
    %382 = vmatmul.f32.gmra.mxu0 %v224
    %v383 = vpop.f32.mrf.mxu0
    %v384 = vadd.f32 %v361, %v383
    %385 = vmatmul.f32.gmra.mxu0 %v226
    %v386 = vpop.f32.mrf.mxu0
    %v387 = vadd.f32 %v364, %v386
    %388 = vdwg.mxu0
    %vm389 = vcmp.gt.f32.partialorder %v338, 0.0
    %vm390 = vcmp.gt.f32.partialorder %v384, 0.0
    %vm391 = vcmp.gt.f32.partialorder %v341, 0.0
    %vm392 = vcmp.gt.f32.partialorder %v387, 0.0
    %v393 = vmul.f32 %v338, 0.01
    %v394 = vmul.f32 %v384, 0.01
    %v395 = vmul.f32 %v341, 0.01
    %v396 = vmul.f32 %v387, 0.01
    %v397 = vsel %vm389, %v338, %v393
    %v398 = vsel %vm390, %v384, %v394
    %v399 = vsel %vm391, %v341, %v395
    %v400 = vsel %vm392, %v387, %v396
    %v401 = vld [vmem:[#allocation10] sm:$0xff]
    %v402 = vld [vmem:[#allocation10 + $0x8] sm:$0xff]
    %v403 = vld [vmem:[#allocation10 + $0x10] sm:$0xff]
    %v404 = vld [vmem:[#allocation10 + $0x18] sm:$0xff]
    %v405 = vld [vmem:[#allocation10 + $0x20] sm:$0xff]
    %v406 = vld [vmem:[#allocation10 + $0x28] sm:$0xff]
    %v407 = vld [vmem:[#allocation10 + $0x30] sm:$0xff]
    %v408 = vld [vmem:[#allocation10 + $0x38] sm:$0xff]
    %v409 = vld [vmem:[#allocation10 + $0x40] sm:$0xff]
    %v410 = vld [vmem:[#allocation10 + $0x48] sm:$0xff]
    %v411 = vld [vmem:[#allocation10 + $0x50] sm:$0xff]
    %v412 = vld [vmem:[#allocation10 + $0x58] sm:$0xff]
    %v413 = vld [vmem:[#allocation10 + $0x60] sm:$0xff]
    %v414 = vld [vmem:[#allocation10 + $0x68] sm:$0xff]
    %v415 = vld [vmem:[#allocation10 + $0x70] sm:$0xff]
    %v416 = vld [vmem:[#allocation10 + $0x78] sm:$0xff]
    %v417 = vld [vmem:[#allocation10 + $0x80] sm:$0xff]
    %v418 = vld [vmem:[#allocation10 + $0x88] sm:$0xff]
    %v419 = vld [vmem:[#allocation10 + $0x90] sm:$0xff]
    %v420 = vld [vmem:[#allocation10 + $0x98] sm:$0xff]
    %v421 = vld [vmem:[#allocation10 + $0xa0] sm:$0xff]
    %v422 = vld [vmem:[#allocation10 + $0xa8] sm:$0xff]
    %v423 = vld [vmem:[#allocation10 + $0xb0] sm:$0xff]
    %v424 = vld [vmem:[#allocation10 + $0xb8] sm:$0xff]
    %v425 = vld [vmem:[#allocation10 + $0xc0] sm:$0xff]
    %v426 = vld [vmem:[#allocation10 + $0xc8] sm:$0xff]
    %v427 = vld [vmem:[#allocation10 + $0xd0] sm:$0xff]
    %v428 = vld [vmem:[#allocation10 + $0xd8] sm:$0xff]
    %v429 = vld [vmem:[#allocation10 + $0xe0] sm:$0xff]
    %v430 = vld [vmem:[#allocation10 + $0xe8] sm:$0xff]
    %v431 = vld [vmem:[#allocation10 + $0xf0] sm:$0xff]
    %v432 = vld [vmem:[#allocation10 + $0xf8] sm:$0xff]
    %v433 = vld [vmem:[#allocation10 + $0x100] sm:$0xff]
    %v434 = vld [vmem:[#allocation10 + $0x108] sm:$0xff]
    %v435 = vld [vmem:[#allocation10 + $0x110] sm:$0xff]
    %v436 = vld [vmem:[#allocation10 + $0x118] sm:$0xff]
    %v437 = vld [vmem:[#allocation10 + $0x120] sm:$0xff]
    %v438 = vld [vmem:[#allocation10 + $0x128] sm:$0xff]
    %v439 = vld [vmem:[#allocation10 + $0x130] sm:$0xff]
    %v440 = vld [vmem:[#allocation10 + $0x138] sm:$0xff]
    %v441 = vld [vmem:[#allocation10 + $0x140] sm:$0xff]
    %v442 = vld [vmem:[#allocation10 + $0x148] sm:$0xff]
    %v443 = vld [vmem:[#allocation10 + $0x150] sm:$0xff]
    %v444 = vld [vmem:[#allocation10 + $0x158] sm:$0xff]
    %v445 = vld [vmem:[#allocation10 + $0x160] sm:$0xff]
    %v446 = vld [vmem:[#allocation10 + $0x168] sm:$0xff]
    %v447 = vld [vmem:[#allocation10 + $0x170] sm:$0xff]
    %v448 = vld [vmem:[#allocation10 + $0x178] sm:$0xff]
    %v449 = vld [vmem:[#allocation10 + $0x180] sm:$0xff]
    %v450 = vld [vmem:[#allocation10 + $0x188] sm:$0xff]
    %v451 = vld [vmem:[#allocation10 + $0x190] sm:$0xff]
    %v452 = vld [vmem:[#allocation10 + $0x198] sm:$0xff]
    %v453 = vld [vmem:[#allocation10 + $0x1a0] sm:$0xff]
    %v454 = vld [vmem:[#allocation10 + $0x1a8] sm:$0xff]
    %v455 = vld [vmem:[#allocation10 + $0x1b0] sm:$0xff]
    %v456 = vld [vmem:[#allocation10 + $0x1b8] sm:$0xff]
    %v457 = vld [vmem:[#allocation10 + $0x1c0] sm:$0xff]
    %v458 = vld [vmem:[#allocation10 + $0x1c8] sm:$0xff]
    %v459 = vld [vmem:[#allocation10 + $0x1d0] sm:$0xff]
    %v460 = vld [vmem:[#allocation10 + $0x1d8] sm:$0xff]
    %v461 = vld [vmem:[#allocation10 + $0x1e0] sm:$0xff]
    %v462 = vld [vmem:[#allocation10 + $0x1e8] sm:$0xff]
    %v463 = vld [vmem:[#allocation10 + $0x1f0] sm:$0xff]
    %v464 = vld [vmem:[#allocation10 + $0x1f8] sm:$0xff]
    %v465 = vld [vmem:[%s6] sm:$0x3]
    %v467 = vperm.slane %v465, 0
    %v468 = vperm.slane %v465, 1
    %471 = vmatpush.msra.mxu0 %v431
    %472 = vmatpush.msra.mxu0 %v429
    %473 = vmatpush.msra.mxu0 %v427
    %474 = vmatpush.msra.mxu0 %v425
    %475 = vmatpush.msra.mxu0 %v423
    %476 = vmatpush.msra.mxu0 %v421
    %477 = vmatpush.msra.mxu0 %v419
    %478 = vmatpush.msra.mxu0 %v417
    %479 = vmatpush.msra.mxu0 %v415
    %480 = vmatpush.msra.mxu0 %v413
    %481 = vmatpush.msra.mxu0 %v411
    %482 = vmatpush.msra.mxu0 %v409
    %483 = vmatpush.msra.mxu0 %v407
    %484 = vmatpush.msra.mxu0 %v405
    %485 = vmatpush.msra.mxu0 %v403
    %486 = vmatpush.msra.mxu0 %v401
    %487 = vmatmul.f32.gmra.mxu0 %v397
    %v488 = vpop.f32.mrf.mxu0
    %v489 = vadd.f32 %v467, %v488
    %490 = vmatmul.f32.gmra.mxu0 %v399
    %v491 = vpop.f32.mrf.mxu0
    %v492 = vadd.f32 %v467, %v491
    %493 = vdwg.mxu0
    %494 = vmatpush.msra.mxu0 %v463
    %495 = vmatpush.msra.mxu0 %v461
    %496 = vmatpush.msra.mxu0 %v459
    %497 = vmatpush.msra.mxu0 %v457
    %498 = vmatpush.msra.mxu0 %v455
    %499 = vmatpush.msra.mxu0 %v453
    %500 = vmatpush.msra.mxu0 %v451
    %501 = vmatpush.msra.mxu0 %v449
    %502 = vmatpush.msra.mxu0 %v447
    %503 = vmatpush.msra.mxu0 %v445
    %504 = vmatpush.msra.mxu0 %v443
    %505 = vmatpush.msra.mxu0 %v441
    %506 = vmatpush.msra.mxu0 %v439
    %507 = vmatpush.msra.mxu0 %v437
    %508 = vmatpush.msra.mxu0 %v435
    %509 = vmatpush.msra.mxu0 %v433
    %510 = vmatmul.f32.gmra.mxu0 %v398
    %v511 = vpop.f32.mrf.mxu0
    %v512 = vadd.f32 %v489, %v511
    %513 = vmatmul.f32.gmra.mxu0 %v400
    %v514 = vpop.f32.mrf.mxu0
    %v515 = vadd.f32 %v492, %v514
    %516 = vdwg.mxu0
    %517 = vmatpush.msra.mxu0 %v432
    %518 = vmatpush.msra.mxu0 %v430
    %519 = vmatpush.msra.mxu0 %v428
    %520 = vmatpush.msra.mxu0 %v426
    %521 = vmatpush.msra.mxu0 %v424
    %522 = vmatpush.msra.mxu0 %v422
    %523 = vmatpush.msra.mxu0 %v420
    %524 = vmatpush.msra.mxu0 %v418
    %525 = vmatpush.msra.mxu0 %v416
    %526 = vmatpush.msra.mxu0 %v414
    %527 = vmatpush.msra.mxu0 %v412
    %528 = vmatpush.msra.mxu0 %v410
    %529 = vmatpush.msra.mxu0 %v408
    %530 = vmatpush.msra.mxu0 %v406
    %531 = vmatpush.msra.mxu0 %v404
    %532 = vmatpush.msra.mxu0 %v402
    %533 = vmatmul.f32.gmra.mxu0 %v397
    %v534 = vpop.f32.mrf.mxu0
    %v535 = vadd.f32 %v468, %v534
    %536 = vmatmul.f32.gmra.mxu0 %v399
    %v537 = vpop.f32.mrf.mxu0
    %v538 = vadd.f32 %v468, %v537
    %539 = vdwg.mxu0
    %540 = vmatpush.msra.mxu0 %v464
    %541 = vmatpush.msra.mxu0 %v462
    %542 = vmatpush.msra.mxu0 %v460
    %543 = vmatpush.msra.mxu0 %v458
    %544 = vmatpush.msra.mxu0 %v456
    %545 = vmatpush.msra.mxu0 %v454
    %546 = vmatpush.msra.mxu0 %v452
    %547 = vmatpush.msra.mxu0 %v450
    %548 = vmatpush.msra.mxu0 %v448
    %549 = vmatpush.msra.mxu0 %v446
    %550 = vmatpush.msra.mxu0 %v444
    %551 = vmatpush.msra.mxu0 %v442
    %552 = vmatpush.msra.mxu0 %v440
    %553 = vmatpush.msra.mxu0 %v438
    %554 = vmatpush.msra.mxu0 %v436
    %555 = vmatpush.msra.mxu0 %v434
    %556 = vmatmul.f32.gmra.mxu0 %v398
    %v557 = vpop.f32.mrf.mxu0
    %v558 = vadd.f32 %v535, %v557
    %559 = vmatmul.f32.gmra.mxu0 %v400
    %v560 = vpop.f32.mrf.mxu0
    %v561 = vadd.f32 %v538, %v560
    %562 = vdwg.mxu0
    %vm563 = vcmp.gt.f32.partialorder %v512, 0.0
    %vm564 = vcmp.gt.f32.partialorder %v558, 0.0
    %vm565 = vcmp.gt.f32.partialorder %v515, 0.0
    %vm566 = vcmp.gt.f32.partialorder %v561, 0.0
    %v567 = vmul.f32 %v512, 0.01
    %v568 = vmul.f32 %v558, 0.01
    %v569 = vmul.f32 %v515, 0.01
    %v570 = vmul.f32 %v561, 0.01
    %v571 = vsel %vm563, %v512, %v567
    %v572 = vsel %vm564, %v558, %v568
    %v573 = vsel %vm565, %v515, %v569
    %v574 = vsel %vm566, %v561, %v570
    %v575 = vld [vmem:[#allocation11] sm:$0xff]
    %v576 = vld [vmem:[#allocation11 + $0x8] sm:$0xff]
    %v577 = vld [vmem:[#allocation11 + $0x10] sm:$0xff]
    %v578 = vld [vmem:[#allocation11 + $0x18] sm:$0xff]
    %v579 = vld [vmem:[#allocation11 + $0x20] sm:$0xff]
    %v580 = vld [vmem:[#allocation11 + $0x28] sm:$0xff]
    %v581 = vld [vmem:[#allocation11 + $0x30] sm:$0xff]
    %v582 = vld [vmem:[#allocation11 + $0x38] sm:$0xff]
    %v583 = vld [vmem:[#allocation11 + $0x40] sm:$0xff]
    %v584 = vld [vmem:[#allocation11 + $0x48] sm:$0xff]
    %v585 = vld [vmem:[#allocation11 + $0x50] sm:$0xff]
    %v586 = vld [vmem:[#allocation11 + $0x58] sm:$0xff]
    %v587 = vld [vmem:[#allocation11 + $0x60] sm:$0xff]
    %v588 = vld [vmem:[#allocation11 + $0x68] sm:$0xff]
    %v589 = vld [vmem:[#allocation11 + $0x70] sm:$0xff]
    %v590 = vld [vmem:[#allocation11 + $0x78] sm:$0xff]
    %v591 = vld [vmem:[#allocation11 + $0x80] sm:$0xff]
    %v592 = vld [vmem:[#allocation11 + $0x88] sm:$0xff]
    %v593 = vld [vmem:[#allocation11 + $0x90] sm:$0xff]
    %v594 = vld [vmem:[#allocation11 + $0x98] sm:$0xff]
    %v595 = vld [vmem:[#allocation11 + $0xa0] sm:$0xff]
    %v596 = vld [vmem:[#allocation11 + $0xa8] sm:$0xff]
    %v597 = vld [vmem:[#allocation11 + $0xb0] sm:$0xff]
    %v598 = vld [vmem:[#allocation11 + $0xb8] sm:$0xff]
    %v599 = vld [vmem:[#allocation11 + $0xc0] sm:$0xff]
    %v600 = vld [vmem:[#allocation11 + $0xc8] sm:$0xff]
    %v601 = vld [vmem:[#allocation11 + $0xd0] sm:$0xff]
    %v602 = vld [vmem:[#allocation11 + $0xd8] sm:$0xff]
    %v603 = vld [vmem:[#allocation11 + $0xe0] sm:$0xff]
    %v604 = vld [vmem:[#allocation11 + $0xe8] sm:$0xff]
    %v605 = vld [vmem:[#allocation11 + $0xf0] sm:$0xff]
    %v606 = vld [vmem:[#allocation11 + $0xf8] sm:$0xff]
    %v607 = vld [vmem:[#allocation11 + $0x100] sm:$0xff]
    %v608 = vld [vmem:[#allocation11 + $0x108] sm:$0xff]
    %v609 = vld [vmem:[#allocation11 + $0x110] sm:$0xff]
    %v610 = vld [vmem:[#allocation11 + $0x118] sm:$0xff]
    %v611 = vld [vmem:[#allocation11 + $0x120] sm:$0xff]
    %v612 = vld [vmem:[#allocation11 + $0x128] sm:$0xff]
    %v613 = vld [vmem:[#allocation11 + $0x130] sm:$0xff]
    %v614 = vld [vmem:[#allocation11 + $0x138] sm:$0xff]
    %v615 = vld [vmem:[#allocation11 + $0x140] sm:$0xff]
    %v616 = vld [vmem:[#allocation11 + $0x148] sm:$0xff]
    %v617 = vld [vmem:[#allocation11 + $0x150] sm:$0xff]
    %v618 = vld [vmem:[#allocation11 + $0x158] sm:$0xff]
    %v619 = vld [vmem:[#allocation11 + $0x160] sm:$0xff]
    %v620 = vld [vmem:[#allocation11 + $0x168] sm:$0xff]
    %v621 = vld [vmem:[#allocation11 + $0x170] sm:$0xff]
    %v622 = vld [vmem:[#allocation11 + $0x178] sm:$0xff]
    %v623 = vld [vmem:[#allocation11 + $0x180] sm:$0xff]
    %v624 = vld [vmem:[#allocation11 + $0x188] sm:$0xff]
    %v625 = vld [vmem:[#allocation11 + $0x190] sm:$0xff]
    %v626 = vld [vmem:[#allocation11 + $0x198] sm:$0xff]
    %v627 = vld [vmem:[#allocation11 + $0x1a0] sm:$0xff]
    %v628 = vld [vmem:[#allocation11 + $0x1a8] sm:$0xff]
    %v629 = vld [vmem:[#allocation11 + $0x1b0] sm:$0xff]
    %v630 = vld [vmem:[#allocation11 + $0x1b8] sm:$0xff]
    %v631 = vld [vmem:[#allocation11 + $0x1c0] sm:$0xff]
    %v632 = vld [vmem:[#allocation11 + $0x1c8] sm:$0xff]
    %v633 = vld [vmem:[#allocation11 + $0x1d0] sm:$0xff]
    %v634 = vld [vmem:[#allocation11 + $0x1d8] sm:$0xff]
    %v635 = vld [vmem:[#allocation11 + $0x1e0] sm:$0xff]
    %v636 = vld [vmem:[#allocation11 + $0x1e8] sm:$0xff]
    %v637 = vld [vmem:[#allocation11 + $0x1f0] sm:$0xff]
    %v638 = vld [vmem:[#allocation11 + $0x1f8] sm:$0xff]
    %v639 = vld [vmem:[%s8] sm:$0x3]
    %v641 = vperm.slane %v639, 0
    %v642 = vperm.slane %v639, 1
    %645 = vmatpush.msra.mxu0 %v605
    %646 = vmatpush.msra.mxu0 %v603
    %647 = vmatpush.msra.mxu0 %v601
    %648 = vmatpush.msra.mxu0 %v599
    %649 = vmatpush.msra.mxu0 %v597
    %650 = vmatpush.msra.mxu0 %v595
    %651 = vmatpush.msra.mxu0 %v593
    %652 = vmatpush.msra.mxu0 %v591
    %653 = vmatpush.msra.mxu0 %v589
    %654 = vmatpush.msra.mxu0 %v587
    %655 = vmatpush.msra.mxu0 %v585
    %656 = vmatpush.msra.mxu0 %v583
    %657 = vmatpush.msra.mxu0 %v581
    %658 = vmatpush.msra.mxu0 %v579
    %659 = vmatpush.msra.mxu0 %v577
    %660 = vmatpush.msra.mxu0 %v575
    %661 = vmatmul.f32.gmra.mxu0 %v571
    %v662 = vpop.f32.mrf.mxu0
    %v663 = vadd.f32 %v641, %v662
    %664 = vmatmul.f32.gmra.mxu0 %v573
    %v665 = vpop.f32.mrf.mxu0
    %v666 = vadd.f32 %v641, %v665
    %667 = vdwg.mxu0
    %668 = vmatpush.msra.mxu0 %v637
    %669 = vmatpush.msra.mxu0 %v635
    %670 = vmatpush.msra.mxu0 %v633
    %671 = vmatpush.msra.mxu0 %v631
    %672 = vmatpush.msra.mxu0 %v629
    %673 = vmatpush.msra.mxu0 %v627
    %674 = vmatpush.msra.mxu0 %v625
    %675 = vmatpush.msra.mxu0 %v623
    %676 = vmatpush.msra.mxu0 %v621
    %677 = vmatpush.msra.mxu0 %v619
    %678 = vmatpush.msra.mxu0 %v617
    %679 = vmatpush.msra.mxu0 %v615
    %680 = vmatpush.msra.mxu0 %v613
    %681 = vmatpush.msra.mxu0 %v611
    %682 = vmatpush.msra.mxu0 %v609
    %683 = vmatpush.msra.mxu0 %v607
    %684 = vmatmul.f32.gmra.mxu0 %v572
    %v685 = vpop.f32.mrf.mxu0
    %v686 = vadd.f32 %v663, %v685
    %687 = vmatmul.f32.gmra.mxu0 %v574
    %v688 = vpop.f32.mrf.mxu0
    %v689 = vadd.f32 %v666, %v688
    %690 = vdwg.mxu0
    %691 = vmatpush.msra.mxu0 %v606
    %692 = vmatpush.msra.mxu0 %v604
    %693 = vmatpush.msra.mxu0 %v602
    %694 = vmatpush.msra.mxu0 %v600
    %695 = vmatpush.msra.mxu0 %v598
    %696 = vmatpush.msra.mxu0 %v596
    %697 = vmatpush.msra.mxu0 %v594
    %698 = vmatpush.msra.mxu0 %v592
    %699 = vmatpush.msra.mxu0 %v590
    %700 = vmatpush.msra.mxu0 %v588
    %701 = vmatpush.msra.mxu0 %v586
    %702 = vmatpush.msra.mxu0 %v584
    %703 = vmatpush.msra.mxu0 %v582
    %704 = vmatpush.msra.mxu0 %v580
    %705 = vmatpush.msra.mxu0 %v578
    %706 = vmatpush.msra.mxu0 %v576
    %707 = vmatmul.f32.gmra.mxu0 %v571
    %v708 = vpop.f32.mrf.mxu0
    %v709 = vadd.f32 %v642, %v708
    %710 = vmatmul.f32.gmra.mxu0 %v573
    %v711 = vpop.f32.mrf.mxu0
    %v712 = vadd.f32 %v642, %v711
    %713 = vdwg.mxu0
    %714 = vmatpush.msra.mxu0 %v638
    %715 = vmatpush.msra.mxu0 %v636
    %716 = vmatpush.msra.mxu0 %v634
    %717 = vmatpush.msra.mxu0 %v632
    %718 = vmatpush.msra.mxu0 %v630
    %719 = vmatpush.msra.mxu0 %v628
    %720 = vmatpush.msra.mxu0 %v626
    %721 = vmatpush.msra.mxu0 %v624
    %722 = vmatpush.msra.mxu0 %v622
    %723 = vmatpush.msra.mxu0 %v620
    %724 = vmatpush.msra.mxu0 %v618
    %725 = vmatpush.msra.mxu0 %v616
    %726 = vmatpush.msra.mxu0 %v614
    %727 = vmatpush.msra.mxu0 %v612
    %728 = vmatpush.msra.mxu0 %v610
    %729 = vmatpush.msra.mxu0 %v608
    %730 = vmatmul.f32.gmra.mxu0 %v572
    %v731 = vpop.f32.mrf.mxu0
    %v732 = vadd.f32 %v709, %v731
    %733 = vmatmul.f32.gmra.mxu0 %v574
    %v734 = vpop.f32.mrf.mxu0
    %v735 = vadd.f32 %v712, %v734
    %736 = vdwg.mxu0
    %vm737 = vcmp.gt.f32.partialorder %v686, 0.0
    %vm738 = vcmp.gt.f32.partialorder %v732, 0.0
    %vm739 = vcmp.gt.f32.partialorder %v689, 0.0
    %vm740 = vcmp.gt.f32.partialorder %v735, 0.0
    %v741 = vmul.f32 %v686, 0.01
    %v742 = vmul.f32 %v732, 0.01
    %v743 = vmul.f32 %v689, 0.01
    %v744 = vmul.f32 %v735, 0.01
    %v745 = vsel %vm737, %v686, %v741
    %v746 = vsel %vm738, %v732, %v742
    %v747 = vsel %vm739, %v689, %v743
    %v748 = vsel %vm740, %v735, %v744
    %v749 = vld [vmem:[#allocation13] sm:$0xff]
    %v750 = vld [vmem:[#allocation13 + $0x8] sm:$0xff]
    %v751 = vld [vmem:[#allocation13 + $0x10] sm:$0xff]
    %v752 = vld [vmem:[#allocation13 + $0x18] sm:$0xff]
    %v753 = vld [vmem:[#allocation13 + $0x20] sm:$0xff]
    %v754 = vld [vmem:[#allocation13 + $0x28] sm:$0xff]
    %v755 = vld [vmem:[#allocation13 + $0x30] sm:$0xff]
    %v756 = vld [vmem:[#allocation13 + $0x38] sm:$0xff]
    %v757 = vld [vmem:[#allocation13 + $0x40] sm:$0xff]
    %v758 = vld [vmem:[#allocation13 + $0x48] sm:$0xff]
    %v759 = vld [vmem:[#allocation13 + $0x50] sm:$0xff]
    %v760 = vld [vmem:[#allocation13 + $0x58] sm:$0xff]
    %v761 = vld [vmem:[#allocation13 + $0x60] sm:$0xff]
    %v762 = vld [vmem:[#allocation13 + $0x68] sm:$0xff]
    %v763 = vld [vmem:[#allocation13 + $0x70] sm:$0xff]
    %v764 = vld [vmem:[#allocation13 + $0x78] sm:$0xff]
    %v765 = vld [vmem:[#allocation13 + $0x80] sm:$0xff]
    %v766 = vld [vmem:[#allocation13 + $0x88] sm:$0xff]
    %v767 = vld [vmem:[#allocation13 + $0x90] sm:$0xff]
    %v768 = vld [vmem:[#allocation13 + $0x98] sm:$0xff]
    %v769 = vld [vmem:[#allocation13 + $0xa0] sm:$0xff]
    %v770 = vld [vmem:[#allocation13 + $0xa8] sm:$0xff]
    %v771 = vld [vmem:[#allocation13 + $0xb0] sm:$0xff]
    %v772 = vld [vmem:[#allocation13 + $0xb8] sm:$0xff]
    %v773 = vld [vmem:[#allocation13 + $0xc0] sm:$0xff]
    %v774 = vld [vmem:[#allocation13 + $0xc8] sm:$0xff]
    %v775 = vld [vmem:[#allocation13 + $0xd0] sm:$0xff]
    %v776 = vld [vmem:[#allocation13 + $0xd8] sm:$0xff]
    %v777 = vld [vmem:[#allocation13 + $0xe0] sm:$0xff]
    %v778 = vld [vmem:[#allocation13 + $0xe8] sm:$0xff]
    %v779 = vld [vmem:[#allocation13 + $0xf0] sm:$0xff]
    %v780 = vld [vmem:[#allocation13 + $0xf8] sm:$0xff]
    %v781 = vld [vmem:[%s10] sm:$0x1]
    %v783 = vperm.slane %v781, 0
    %785 = vmatpush.msra.mxu0 %v764
    %786 = vmatpush.msra.mxu0 %v763
    %787 = vmatpush.msra.mxu0 %v762
    %788 = vmatpush.msra.mxu0 %v761
    %789 = vmatpush.msra.mxu0 %v760
    %790 = vmatpush.msra.mxu0 %v759
    %791 = vmatpush.msra.mxu0 %v758
    %792 = vmatpush.msra.mxu0 %v757
    %793 = vmatpush.msra.mxu0 %v756
    %794 = vmatpush.msra.mxu0 %v755
    %795 = vmatpush.msra.mxu0 %v754
    %796 = vmatpush.msra.mxu0 %v753
    %797 = vmatpush.msra.mxu0 %v752
    %798 = vmatpush.msra.mxu0 %v751
    %799 = vmatpush.msra.mxu0 %v750
    %800 = vmatpush.msra.mxu0 %v749
    %801 = vmatmul.f32.gmra.mxu0 %v745
    %v802 = vpop.f32.mrf.mxu0
    %v803 = vadd.f32 %v783, %v802
    %804 = vmatmul.f32.gmra.mxu0 %v747
    %v805 = vpop.f32.mrf.mxu0
    %v806 = vadd.f32 %v783, %v805
    %807 = vdwg.mxu0
    %808 = vmatpush.msra.mxu0 %v780
    %809 = vmatpush.msra.mxu0 %v779
    %810 = vmatpush.msra.mxu0 %v778
    %811 = vmatpush.msra.mxu0 %v777
    %812 = vmatpush.msra.mxu0 %v776
    %813 = vmatpush.msra.mxu0 %v775
    %814 = vmatpush.msra.mxu0 %v774
    %815 = vmatpush.msra.mxu0 %v773
    %816 = vmatpush.msra.mxu0 %v772
    %817 = vmatpush.msra.mxu0 %v771
    %818 = vmatpush.msra.mxu0 %v770
    %819 = vmatpush.msra.mxu0 %v769
    %820 = vmatpush.msra.mxu0 %v768
    %821 = vmatpush.msra.mxu0 %v767
    %822 = vmatpush.msra.mxu0 %v766
    %823 = vmatpush.msra.mxu0 %v765
    %824 = vmatmul.f32.gmra.mxu0 %v746
    %v825 = vpop.f32.mrf.mxu0
    %v826 = vadd.f32 %v803, %v825
    %827 = vmatmul.f32.gmra.mxu0 %v748
    %v828 = vpop.f32.mrf.mxu0
    %v829 = vadd.f32 %v806, %v828
    %830 = vdwg.mxu0
    %831 = vst [vmem:[#allocation14] sm:$0xff] %v826
    %832 = vst [vmem:[#allocation14 + $0x8] sm:$0xff] %v829
    // Predicated region
    $region74: #{tpu_custom_call.1} parent=1 // pred_check
      _
    $region75: #{tpu_custom_call.1} parent=1 // pred_check_branch
      %834 = sbr.rel (0) target = $region77
    $region76: #{tpu_custom_call.1} parent=1 // pred_region
      %836 = vsyncadd [#allocation4], 0
      %s837 = sshll.u32 [#allocation14], 4
      %s838 = int_to_ptr.vmem [resolvable:$true] %s837
      %s839 = sshll.u32 %s11, 4
      %s840 = int_to_ptr.hbm [resolvable:$true] %s839
      %845 = dma.vmem_to_hbm [thread:$0]  %s838, 256, %s840, [#allocation4], 128, 128, 8
    $region77: #{tpu_custom_call.1} parent=1 // pred_fallthru
      _
    // Predicated region
    $region78: #{tpu_custom_call.1} parent=1 // pred_check
      _
    $region79: #{tpu_custom_call.1} parent=1 // pred_check_branch
      %847 = sbr.rel (0) target = $region81
    $region80: #{tpu_custom_call.1} parent=1 // pred_region
      %849 = dma.done [#allocation4], 256
    $region81: #{tpu_custom_call.1} parent=1 // pred_fallthru
      _
    %850 = vsyncpa [#allocation3], 1
    %851 = vsyncpa [#allocation6], 1
    %852 = vsyncpa [#allocation9], 1
    %853 = vsyncpa [#allocation12], 1
    %854 = vsyncpa [#allocation4], 1

</llo_original>
